<compile_context>
chip_gen: v5e
topology: v5e:2x2
jax: 0.10.0
libtpu: 0.0.40
codegen_flags: <defaults>
</compile_context>

<pallas_src>
import jax
import jax.numpy as jnp
from jax.experimental import pallas as pl
from jax.experimental.pallas import tpu as pltpu  # noqa: F401  (TPU backend)

# ---- small, module-consistent sizes ----
B = 2         # batch
E = 32        # word_vec_size (embedding dim)
H = 32        # hidden_size
T = 8         # encoder sequence length
L = 4         # number of previous decoder hidden states in prev_s
LP = 8        # prev_s padded to a full sublane group
VOCAB = 128   # vocab_size
N_EXTRA = 16  # extra (copied OOV) vocabulary slots
V_EXT = VOCAB + N_EXTRA

# lane offsets inside the packed data input (B, DATA_W)
D_XC, D_H, D_C, D_MASK, D_SUM = 0, 96, 128, 160, 168
DATA_W = 176

# lane offsets inside the packed output (B, OUT_W)
O_FIN, O_DH, O_DC, O_CE, O_ST = 0, 144, 176, 208, 272
OUT_W = 384
OUT_PAD = OUT_W - (O_ST + T)


# ----------------------------------------------------------------------------
# Pallas kernel: one decoder step for the WHOLE batch (single invocation)
# ----------------------------------------------------------------------------
def decoder_kernel(data_ref, enc_out_ref, prev_s_ref, ext_vocab_ref,
                   slab_a_ref, slab_b_ref, w_vpg_ref, rows_ref, out_ref):
    f32 = jnp.float32

    def dot(a, b):
        return jnp.dot(a, b, preferred_element_type=f32)

    # ---- unpack the lane-dense data slab ------------------------------------
    data = data_ref[...]                                    # (B, 176)
    xc_in = data[:, D_XC:D_XC + E + 2 * H]                  # (B, 96) = [x_t|ct_e]
    h_prev = data[:, D_H:D_H + H]
    c_prev = data[:, D_C:D_C + H]
    mask = data[:, D_MASK:D_MASK + T]
    sum_temp = data[:, D_SUM:D_SUM + T]

    # ---- unpack the packed parameters (static VMEM slices) ------------------
    w_lstm = slab_a_ref[0:64, :]                            # (E+H, 4H)
    w_v1 = slab_a_ref[64:96, :]                             # (H, VOCAB)
    w_eh = slab_b_ref[0:64, 0:64]                           # (2H, 2H)
    w_es = slab_b_ref[0:64, 64:128]                         # (2H, 2H)
    w_xc = slab_b_ref[64:160, 0:32]                         # (E+2H, E)
    w_dp = slab_b_ref[64:96, 32:64]                         # (H, H)
    w_ds = slab_b_ref[64:96, 64:96]                         # (H, H)
    b_lstm = rows_ref[0:1, :]                               # (1, 4H)
    b_v1 = rows_ref[1:2, :]                                 # (1, VOCAB)
    b_es = rows_ref[2:3, 0:64]
    v_e = rows_ref[2:3, 64:128]
    b_xc = rows_ref[3:4, 0:32]
    b_ds = rows_ref[3:4, 32:64]
    v_d = rows_ref[3:4, 64:96]
    b_vpg = rows_ref[4:5, 0:H + 1]                          # [b_v | b_pg]

    # ---- x = x_context(cat([x_t, ct_e]))  (concat + weight fusion host-side)
    x = dot(xc_in, w_xc) + b_xc                             # (B, E)

    # ---- LSTMCell: ONE fused gate matmul; gate cols pre-permuted (i,f,o,g) --
    xh = jnp.concatenate([x, h_prev], axis=1)               # (B, E+H)
    gates = dot(xh, w_lstm) + b_lstm                        # (B, 4H)
    sig = jax.nn.sigmoid(gates[:, 0:3 * H])                 # i | f | o
    g_g = jnp.tanh(gates[:, 3 * H:4 * H])
    i_g = sig[:, 0:H]
    f_g = sig[:, H:2 * H]
    o_g = sig[:, 2 * H:3 * H]
    dec_c = f_g * c_prev + i_g * g_g                        # (B, H)
    dec_h = o_g * jnp.tanh(dec_c)                           # (B, H)
    st_hat = jnp.concatenate([dec_h, dec_c], axis=1)        # (B, 2H)

    # ---- intra-temporal encoder attention -----------------------------------
    enc_out = enc_out_ref[...]                              # (B, T, 2H)
    et = dot(enc_out.reshape(B * T, 2 * H), w_eh).reshape(B, T, 2 * H)
    dec_fea = dot(st_hat, w_es) + b_es                      # (B, 2H), one dot
    et = jnp.tanh(et + dec_fea[:, None, :])                 # (B, T, 2H)
    scores = jnp.sum(et * v_e, axis=2)                      # (B, T)
    exp_et = jnp.exp(scores)
    et1 = exp_et / sum_temp                                 # exact (state chain)
    sum_new = sum_temp + exp_et                             # (B, T)
    at = et1 * mask
    # ct_e is a directly-compared output -> keep this normalization exact.
    at = at * pl.reciprocal(jnp.sum(at, axis=1, keepdims=True), approx=False)
    ct_e = jnp.sum(at[:, :, None] * enc_out, axis=1)        # (B, 2H) VPU+XLU

    # ---- intra-decoder attention (prev_s padded to LP rows, pads masked) ----
    prev_s = prev_s_ref[...]                                # (B, LP, H)
    etd = dot(prev_s.reshape(B * LP, H), w_dp).reshape(B, LP, H)
    dfea = dot(dec_h, w_ds) + b_ds                          # (B, H)
    etd = jnp.tanh(etd + dfea[:, None, :])                  # (B, LP, H)
    d_scores = jnp.sum(etd * v_d, axis=2)                   # (B, LP)
    d_scores = d_scores - jnp.max(d_scores, axis=1, keepdims=True)
    valid = (jax.lax.broadcasted_iota(jnp.int32, (B, LP), 1) < L).astype(f32)
    e_d = jnp.exp(d_scores) * valid
    a_d = e_d * pl.reciprocal(jnp.sum(e_d, axis=1, keepdims=True), approx=True)
    ct_d = jnp.sum(a_d[:, :, None] * prev_s, axis=1)        # (B, H) VPU+XLU

    # ---- fused V + p_gen: one (B,192)@(192,H+1) matmul ----------------------
    vpg_in = jnp.concatenate([dec_h, ct_e, ct_d, dec_c, x], axis=1)  # (B, 192)
    vpg = dot(vpg_in, w_vpg_ref[...]) + b_vpg               # (B, H+1)
    v_out = vpg[:, 0:H]                                     # (B, H)
    p_gen = jax.nn.sigmoid(vpg[:, H:H + 1])                 # (B, 1)

    # ---- vocab distribution ---------------------------------------------------
    logits = dot(v_out, w_v1) + b_v1                        # (B, VOCAB)
    logits = logits - jnp.max(logits, axis=1, keepdims=True)
    exp_l = jnp.exp(logits)
    vocab_dist = exp_l * pl.reciprocal(jnp.sum(exp_l, axis=1, keepdims=True),
                                       approx=True)
    vocab_dist = p_gen * vocab_dist                         # (B, VOCAB)
    attn_dist = (1.0 - p_gen) * at                          # (B, T)

    # ---- pointer scatter-add via one-hot weighted sum (VPU + sublane reduce)
    idx = ext_vocab_ref[...]                                # (B, T) int32
    col = jax.lax.broadcasted_iota(jnp.int32, (B, T, V_EXT), 2)
    onehot = (col == idx[:, :, None]).astype(f32)           # (B, T, V_EXT)
    ptr = jnp.sum(attn_dist[:, :, None] * onehot, axis=1)   # (B, V_EXT)

    # extra_zeros is all zeros: the extended-vocab tail is just `ptr`.
    final = jnp.concatenate(
        [vocab_dist, jnp.zeros((B, N_EXTRA), f32)], axis=1) + ptr   # (B, V_EXT)

    # ---- one lane-dense packed store (single output DMA) --------------------
    packed = jnp.concatenate(
        [final, dec_h, dec_c, ct_e, sum_new, jnp.zeros((B, OUT_PAD), f32)],
        axis=1)                                             # (B, OUT_W)
    out_ref[...] = packed


# ----------------------------------------------------------------------------
# Wrapper: host-side parameter packing / layout glue + single pallas_call
# ----------------------------------------------------------------------------
def decoder_forward(x_t, s_t, enc_out, enc_padding_mask, ct_e, extra_zeros,
                    enc_batch_extend_vocab, sum_temporal_srcs, prev_s, params):
    del extra_zeros  # all zeros; the kernel writes the extended tail directly
    h0, c0 = s_t
    p = params
    f32 = jnp.float32

    def ifog(w):  # PyTorch LSTM gate columns (i,f,g,o) -> (i,f,o,g)
        return jnp.concatenate([w[:, :2 * H], w[:, 3 * H:], w[:, 2 * H:3 * H]],
                               axis=1)

    # slab_a: fused LSTM weight (64,128) stacked over V1 weight (32,128)
    w_lstm = jnp.concatenate([ifog(p["w_ih"]), ifog(p["w_hh"])], axis=0)
    slab_a = jnp.concatenate([w_lstm, p["w_v1"]], axis=0)           # (96, 128)

    # slab_b: attention + x_context weights, lane-paired to 128 lanes
    slab_b = jnp.zeros((160, 128), f32)
    slab_b = slab_b.at[0:64, 0:64].set(p["w_eh"])
    slab_b = slab_b.at[0:64, 64:128].set(p["w_es"])
    slab_b = slab_b.at[64:160, 0:32].set(p["w_xc"])
    slab_b = slab_b.at[64:96, 32:64].set(p["w_dp"])
    slab_b = slab_b.at[64:96, 64:96].set(p["w_ds"])

    # fused V + p_gen weight; kernel input order [dec_h | ct_e | ct_d | dec_c | x]
    w_vpg = jnp.zeros((192, H + 1), f32)
    w_vpg = w_vpg.at[0:128, 0:H].set(p["w_v"])       # V: [dec_h, ct_e, ct_d]
    w_pg = p["w_pg"]                                 # [ct_e, ct_d, dec_h, dec_c, x]
    w_vpg = w_vpg.at[0:32, H:].set(w_pg[96:128])     # dec_h
    w_vpg = w_vpg.at[32:96, H:].set(w_pg[0:64])      # ct_e
    w_vpg = w_vpg.at[96:128, H:].set(w_pg[64:96])    # ct_d
    w_vpg = w_vpg.at[128:192, H:].set(w_pg[128:192])  # dec_c, x

    # small row-packed params
    rows = jnp.zeros((5, 128), f32)
    rows = rows.at[0, :].set(ifog(p["b_lstm"])[0])
    rows = rows.at[1, :].set(p["b_v1"][0])
    rows = rows.at[2, 0:64].set(p["b_es"][0])
    rows = rows.at[2, 64:128].set(p["v_e"][:, 0])
    rows = rows.at[3, 0:32].set(p["b_xc"][0])
    rows = rows.at[3, 32:64].set(p["b_ds"][0])
    rows = rows.at[3, 64:96].set(p["v_d"][:, 0])
    rows = rows.at[4, 0:H].set(p["b_v"][0])
    rows = rows.at[4, H].set(p["b_pg"][0, 0])

    # lane-dense data slab + prev_s padded to a full sublane group
    data = jnp.concatenate([x_t, ct_e, h0, c0, enc_padding_mask,
                            sum_temporal_srcs], axis=1)             # (B, 176)
    prev_s_pad = jnp.pad(prev_s, ((0, 0), (0, LP - L), (0, 0)))     # (B, LP, H)
    ext_vocab = enc_batch_extend_vocab.astype(jnp.int32)            # (B, T)

    out = pl.pallas_call(
        decoder_kernel,
        out_shape=jax.ShapeDtypeStruct((B, OUT_W), jnp.float32),
    )(data, enc_out, prev_s_pad, ext_vocab, slab_a, slab_b, w_vpg, rows)

    final = out[:, O_FIN:O_FIN + V_EXT]
    dec_h = out[:, O_DH:O_DH + H]
    dec_c = out[:, O_DC:O_DC + H]
    ct_e_new = out[:, O_CE:O_CE + 2 * H]
    sum_new = out[:, O_ST:O_ST + T]
    prev_s_new = jnp.concatenate([prev_s, dec_h[:, None, :]], axis=1)  # glue
    return final, (dec_h, dec_c), ct_e_new, sum_new, prev_s_new


# ----------------------------------------------------------------------------
# Deterministic parameter init (shapes from the module __init__)
# ----------------------------------------------------------------------------
def init_params(key):
    ks = iter(jax.random.split(key, 20))

    def uni(kk, shape, bound):
        return jax.random.uniform(kk, shape, jnp.float32, -bound, bound)

    p = {}
    # x_context: Linear(2H + E -> E), default PyTorch init
    bnd = (2 * H + E) ** -0.5
    p["w_xc"] = uni(next(ks), (2 * H + E, E), bnd)
    p["b_xc"] = uni(next(ks), (1, E), bnd)
    # LSTMCell(E -> H): init_lstm_wt (uniform +-0.02, forget-gate bias = 1.0)
    p["w_ih"] = uni(next(ks), (E, 4 * H), 0.02)
    p["w_hh"] = uni(next(ks), (H, 4 * H), 0.02)
    p["b_lstm"] = 2.0 * jnp.zeros((1, 4 * H), jnp.float32).at[:, H:2 * H].set(1.0)
    # encoder_attention: W_h (no bias), W_s, v (no bias)
    bnd = (2 * H) ** -0.5
    p["w_eh"] = uni(next(ks), (2 * H, 2 * H), bnd)
    p["w_es"] = uni(next(ks), (2 * H, 2 * H), bnd)
    p["b_es"] = uni(next(ks), (1, 2 * H), bnd)
    p["v_e"] = uni(next(ks), (2 * H, 1), bnd)
    # decoder_attention: W_prev (no bias), W_s, v (no bias)
    bnd = H ** -0.5
    p["w_dp"] = uni(next(ks), (H, H), bnd)
    p["w_ds"] = uni(next(ks), (H, H), bnd)
    p["b_ds"] = uni(next(ks), (1, H), bnd)
    p["v_d"] = uni(next(ks), (H, 1), bnd)
    # p_gen_linear: Linear(5H + E -> 1), input order [ct_e, ct_d, dec_h, dec_c, x]
    bnd = (5 * H + E) ** -0.5
    p["w_pg"] = uni(next(ks), (5 * H + E, 1), bnd)
    p["b_pg"] = uni(next(ks), (1, 1), bnd)
    # V: Linear(4H -> H), input order [dec_h, ct_e, ct_d]
    bnd = (4 * H) ** -0.5
    p["w_v"] = uni(next(ks), (4 * H, H), bnd)
    p["b_v"] = uni(next(ks), (1, H), bnd)
    # V1: Linear(H -> vocab), init_linear_wt (normal std=1e-4)
    p["w_v1"] = 1e-4 * jax.random.normal(next(ks), (H, VOCAB), jnp.float32)
    p["b_v1"] = 1e-4 * jax.random.normal(next(ks), (1, VOCAB), jnp.float32)
    return p


# ----------------------------------------------------------------------------
# Pure-JAX reference (mirrors the PyTorch forward) for validation
# ----------------------------------------------------------------------------
def reference_forward(x_t, s_t, enc_out, enc_padding_mask, ct_e, extra_zeros,
                      enc_ext_vocab, sum_temporal_srcs, prev_s, p):
    h_prev, c_prev = s_t
    x = jnp.concatenate([x_t, ct_e], axis=1) @ p["w_xc"] + p["b_xc"]
    gates = x @ p["w_ih"] + h_prev @ p["w_hh"] + p["b_lstm"]
    i_g = jax.nn.sigmoid(gates[:, :H]); f_g = jax.nn.sigmoid(gates[:, H:2 * H])
    g_g = jnp.tanh(gates[:, 2 * H:3 * H]); o_g = jax.nn.sigmoid(gates[:, 3 * H:])
    dec_c = f_g * c_prev + i_g * g_g
    dec_h = o_g * jnp.tanh(dec_c)
    st_hat = jnp.concatenate([dec_h, dec_c], axis=1)
    # encoder attention (intra-temporal)
    et = enc_out @ p["w_eh"]
    dec_fea = st_hat @ p["w_es"] + p["b_es"]
    et = jnp.tanh(et + dec_fea[:, None, :])
    et = (et @ p["v_e"])[..., 0]
    exp_et = jnp.exp(et)
    et1 = exp_et / sum_temporal_srcs
    sum_new = sum_temporal_srcs + exp_et
    at = et1 * enc_padding_mask
    at = at / at.sum(axis=1, keepdims=True)
    ct_e_new = jnp.einsum("bt,btd->bd", at, enc_out)
    # decoder attention
    etd = prev_s @ p["w_dp"]
    dfea = dec_h @ p["w_ds"] + p["b_ds"]
    etd = jnp.tanh(etd + dfea[:, None, :])
    etd = (etd @ p["v_d"])[..., 0]
    a_d = jax.nn.softmax(etd, axis=1)
    ct_d = jnp.einsum("bl,blh->bh", a_d, prev_s)
    # p_gen
    p_gen = jax.nn.sigmoid(
        jnp.concatenate([ct_e_new, ct_d, st_hat, x], axis=1) @ p["w_pg"]
        + p["b_pg"])
    # vocab distribution
    out = jnp.concatenate([dec_h, ct_e_new, ct_d], axis=1) @ p["w_v"] + p["b_v"]
    logits = out @ p["w_v1"] + p["b_v1"]
    vocab_dist = p_gen * jax.nn.softmax(logits, axis=1)
    attn_dist_ = (1.0 - p_gen) * at
    final = jnp.concatenate([vocab_dist, extra_zeros], axis=1)
    final = final.at[jnp.arange(B)[:, None], enc_ext_vocab].add(attn_dist_)
    prev_s_new = jnp.concatenate([prev_s, dec_h[:, None, :]], axis=1)
    return final, (dec_h, dec_c), ct_e_new, sum_new, prev_s_new


if __name__ == "__main__":
    key = jax.random.PRNGKey(0)
    kp, kd = jax.random.split(key)
    params = init_params(kp)
    ks = jax.random.split(kd, 10)

    x_t = jax.random.normal(ks[0], (B, E), jnp.float32)
    ct_e = 0.5 * jax.random.normal(ks[1], (B, 2 * H), jnp.float32)
    h0 = 0.5 * jax.random.normal(ks[2], (B, H), jnp.float32)
    c0 = 0.5 * jax.random.normal(ks[3], (B, H), jnp.float32)
    enc_out = 0.5 * jax.random.normal(ks[4], (B, T, 2 * H), jnp.float32)
    enc_padding_mask = jnp.ones((B, T), jnp.float32).at[1, T - 2:].set(0.0)
    sum_temporal_srcs = 1e-10 + jax.random.uniform(ks[5], (B, T), jnp.float32,
                                                   0.5, 1.5)
    prev_s = 0.5 * jax.random.normal(ks[6], (B, L, H), jnp.float32)
    extra_zeros = jnp.zeros((B, N_EXTRA), jnp.float32)
    enc_batch_extend_vocab = jax.random.randint(ks[7], (B, T), 0, V_EXT,
                                                jnp.int32)

    outs = decoder_forward(x_t, (h0, c0), enc_out, enc_padding_mask, ct_e,
                           extra_zeros, enc_batch_extend_vocab,
                           sum_temporal_srcs, prev_s, params)
    outs = jax.block_until_ready(outs)
    final, (dec_h, dec_c), ct_e_new, sum_new, prev_s_new = outs

    ref = reference_forward(x_t, (h0, c0), enc_out, enc_padding_mask, ct_e,
                            extra_zeros, enc_batch_extend_vocab,
                            sum_temporal_srcs, prev_s, params)
    rf, (rh, rc), rce, rsum, rps = ref

    def ok(a, b):
        return bool(jnp.allclose(a, b, rtol=1e-3, atol=1e-3))

    assert ok(final, rf), "final_dist mismatch"
    assert ok(dec_h, rh) and ok(dec_c, rc), "LSTM state mismatch"
    assert ok(ct_e_new, rce), "ct_e mismatch"
    assert ok(sum_new, rsum), "sum_temporal_srcs mismatch"
    assert ok(prev_s_new, rps), "prev_s mismatch"

    print("KERNEL_OK")
</pallas_src>

<mosaic_0001>
module attributes {stable_mosaic.version = 11 : i64} {
  func.func @decoder_kernel(%arg0: memref<2x176xf32, #tpu.memory_space<vmem>>, %arg1: memref<2x8x64xf32, #tpu.memory_space<vmem>>, %arg2: memref<2x8x32xf32, #tpu.memory_space<vmem>>, %arg3: memref<2x8xi32, #tpu.memory_space<vmem>>, %arg4: memref<96x128xf32, #tpu.memory_space<vmem>>, %arg5: memref<160x128xf32, #tpu.memory_space<vmem>>, %arg6: memref<192x33xf32, #tpu.memory_space<vmem>>, %arg7: memref<5x128xf32, #tpu.memory_space<vmem>>, %arg8: memref<2x384xf32, #tpu.memory_space<vmem>>) attributes {dimension_semantics = [], scalar_prefetch = 0 : i64, scratch_operands = 0 : i64, tpu.core_type = #tpu.core_type<tc>} {
    %c0 = arith.constant 0 : index
    %c0_0 = arith.constant 0 : index
    %0 = vector.load %arg0[%c0, %c0_0] : memref<2x176xf32, #tpu.memory_space<vmem>>, vector<2x176xf32>
    %1 = vector.extract_strided_slice %0 {offsets = [0, 0], sizes = [2, 96], strides = [1, 1]} : vector<2x176xf32> to vector<2x96xf32>
    %2 = vector.extract_strided_slice %0 {offsets = [0, 96], sizes = [2, 32], strides = [1, 1]} : vector<2x176xf32> to vector<2x32xf32>
    %3 = vector.extract_strided_slice %0 {offsets = [0, 128], sizes = [2, 32], strides = [1, 1]} : vector<2x176xf32> to vector<2x32xf32>
    %4 = vector.extract_strided_slice %0 {offsets = [0, 160], sizes = [2, 8], strides = [1, 1]} : vector<2x176xf32> to vector<2x8xf32>
    %5 = vector.extract_strided_slice %0 {offsets = [0, 168], sizes = [2, 8], strides = [1, 1]} : vector<2x176xf32> to vector<2x8xf32>
    %c0_1 = arith.constant 0 : index
    %c0_2 = arith.constant 0 : index
    %6 = vector.load %arg4[%c0_1, %c0_2] : memref<96x128xf32, #tpu.memory_space<vmem>>, vector<64x128xf32>
    %c64 = arith.constant 64 : index
    %c0_3 = arith.constant 0 : index
    %7 = vector.load %arg4[%c64, %c0_3] : memref<96x128xf32, #tpu.memory_space<vmem>>, vector<32x128xf32>
    %c0_4 = arith.constant 0 : index
    %c0_5 = arith.constant 0 : index
    %8 = vector.load %arg5[%c0_4, %c0_5] : memref<160x128xf32, #tpu.memory_space<vmem>>, vector<64x64xf32>
    %c0_6 = arith.constant 0 : index
    %c64_7 = arith.constant 64 : index
    %9 = vector.load %arg5[%c0_6, %c64_7] : memref<160x128xf32, #tpu.memory_space<vmem>>, vector<64x64xf32>
    %c64_8 = arith.constant 64 : index
    %c0_9 = arith.constant 0 : index
    %10 = vector.load %arg5[%c64_8, %c0_9] : memref<160x128xf32, #tpu.memory_space<vmem>>, vector<96x32xf32>
    %c64_10 = arith.constant 64 : index
    %c32 = arith.constant 32 : index
    %11 = vector.load %arg5[%c64_10, %c32] : memref<160x128xf32, #tpu.memory_space<vmem>>, vector<32x32xf32>
    %c64_11 = arith.constant 64 : index
    %c64_12 = arith.constant 64 : index
    %12 = vector.load %arg5[%c64_11, %c64_12] : memref<160x128xf32, #tpu.memory_space<vmem>>, vector<32x32xf32>
    %c0_13 = arith.constant 0 : index
    %c0_14 = arith.constant 0 : index
    %13 = vector.load %arg7[%c0_13, %c0_14] : memref<5x128xf32, #tpu.memory_space<vmem>>, vector<1x128xf32>
    %c1 = arith.constant 1 : index
    %c0_15 = arith.constant 0 : index
    %14 = vector.load %arg7[%c1, %c0_15] : memref<5x128xf32, #tpu.memory_space<vmem>>, vector<1x128xf32>
    %c2 = arith.constant 2 : index
    %c0_16 = arith.constant 0 : index
    %15 = vector.load %arg7[%c2, %c0_16] : memref<5x128xf32, #tpu.memory_space<vmem>>, vector<1x64xf32>
    %c2_17 = arith.constant 2 : index
    %c64_18 = arith.constant 64 : index
    %16 = vector.load %arg7[%c2_17, %c64_18] : memref<5x128xf32, #tpu.memory_space<vmem>>, vector<1x64xf32>
    %c3 = arith.constant 3 : index
    %c0_19 = arith.constant 0 : index
    %17 = vector.load %arg7[%c3, %c0_19] : memref<5x128xf32, #tpu.memory_space<vmem>>, vector<1x32xf32>
    %c3_20 = arith.constant 3 : index
    %c32_21 = arith.constant 32 : index
    %18 = vector.load %arg7[%c3_20, %c32_21] : memref<5x128xf32, #tpu.memory_space<vmem>>, vector<1x32xf32>
    %c3_22 = arith.constant 3 : index
    %c64_23 = arith.constant 64 : index
    %19 = vector.load %arg7[%c3_22, %c64_23] : memref<5x128xf32, #tpu.memory_space<vmem>>, vector<1x32xf32>
    %c4 = arith.constant 4 : index
    %c0_24 = arith.constant 0 : index
    %20 = vector.load %arg7[%c4, %c0_24] : memref<5x128xf32, #tpu.memory_space<vmem>>, vector<1x33xf32>
    %cst = arith.constant dense<0.000000e+00> : vector<2x32xf32>
    %21 = tpu.matmul %1, %10, %cst {dimension_numbers = #tpu.dot_dimension_numbers<[1], [0], [0], [1], [0, 0, 1, 1], [], []>} : vector<2x96xf32>, vector<96x32xf32>, vector<2x32xf32> -> vector<2x32xf32>
    %22 = vector.broadcast %17 : vector<1x32xf32> to vector<2x32xf32>
    %23 = arith.addf %21, %22 : vector<2x32xf32>
    %24 = tpu.concatenate %23, %2 in 1 : vector<2x32xf32>, vector<2x32xf32> -> vector<2x64xf32>
    %cst_25 = arith.constant dense<0.000000e+00> : vector<2x128xf32>
    %25 = tpu.matmul %24, %6, %cst_25 {dimension_numbers = #tpu.dot_dimension_numbers<[1], [0], [0], [1], [0, 0, 1, 1], [], []>} : vector<2x64xf32>, vector<64x128xf32>, vector<2x128xf32> -> vector<2x128xf32>
    %26 = vector.broadcast %13 : vector<1x128xf32> to vector<2x128xf32>
    %27 = arith.addf %25, %26 : vector<2x128xf32>
    %28 = vector.extract_strided_slice %27 {offsets = [0, 0], sizes = [2, 96], strides = [1, 1]} : vector<2x128xf32> to vector<2x96xf32>
    %29 = arith.negf %28 : vector<2x96xf32>
    %30 = math.exp %29 : vector<2x96xf32>
    %cst_26 = arith.constant 1.000000e+00 : f32
    %31 = vector.broadcast %cst_26 : f32 to vector<2x96xf32>
    %32 = arith.addf %31, %30 : vector<2x96xf32>
    %33 = arith.divf %31, %32 : vector<2x96xf32>
    %34 = vector.extract_strided_slice %27 {offsets = [0, 96], sizes = [2, 32], strides = [1, 1]} : vector<2x128xf32> to vector<2x32xf32>
    %35 = math.tanh %34 : vector<2x32xf32>
    %36 = vector.extract_strided_slice %33 {offsets = [0, 0], sizes = [2, 32], strides = [1, 1]} : vector<2x96xf32> to vector<2x32xf32>
    %37 = vector.extract_strided_slice %33 {offsets = [0, 32], sizes = [2, 32], strides = [1, 1]} : vector<2x96xf32> to vector<2x32xf32>
    %38 = vector.extract_strided_slice %33 {offsets = [0, 64], sizes = [2, 32], strides = [1, 1]} : vector<2x96xf32> to vector<2x32xf32>
    %39 = arith.mulf %37, %3 : vector<2x32xf32>
    %40 = arith.mulf %36, %35 : vector<2x32xf32>
    %41 = arith.addf %39, %40 : vector<2x32xf32>
    %42 = math.tanh %41 : vector<2x32xf32>
    %43 = arith.mulf %38, %42 : vector<2x32xf32>
    %44 = tpu.concatenate %43, %41 in 1 : vector<2x32xf32>, vector<2x32xf32> -> vector<2x64xf32>
    %c0_27 = arith.constant 0 : index
    %c0_28 = arith.constant 0 : index
    %c0_29 = arith.constant 0 : index
    %45 = vector.load %arg1[%c0_27, %c0_28, %c0_29] : memref<2x8x64xf32, #tpu.memory_space<vmem>>, vector<2x8x64xf32>
    %46 = vector.shape_cast %45 : vector<2x8x64xf32> to vector<16x64xf32>
    %cst_30 = arith.constant dense<0.000000e+00> : vector<16x64xf32>
    %47 = tpu.matmul %46, %8, %cst_30 {dimension_numbers = #tpu.dot_dimension_numbers<[1], [0], [0], [1], [0, 0, 1, 1], [], []>} : vector<16x64xf32>, vector<64x64xf32>, vector<16x64xf32> -> vector<16x64xf32>
    %48 = vector.shape_cast %47 : vector<16x64xf32> to vector<2x8x64xf32>
    %cst_31 = arith.constant dense<0.000000e+00> : vector<2x64xf32>
    %49 = tpu.matmul %44, %9, %cst_31 {dimension_numbers = #tpu.dot_dimension_numbers<[1], [0], [0], [1], [0, 0, 1, 1], [], []>} : vector<2x64xf32>, vector<64x64xf32>, vector<2x64xf32> -> vector<2x64xf32>
    %50 = vector.broadcast %15 : vector<1x64xf32> to vector<2x64xf32>
    %51 = arith.addf %49, %50 : vector<2x64xf32>
    %52 = vector.shape_cast %51 : vector<2x64xf32> to vector<2x1x64xf32>
    %53 = vector.broadcast %52 : vector<2x1x64xf32> to vector<2x8x64xf32>
    %54 = arith.addf %48, %53 : vector<2x8x64xf32>
    %55 = math.tanh %54 : vector<2x8x64xf32>
    %56 = vector.shape_cast %16 : vector<1x64xf32> to vector<1x1x64xf32>
    %57 = vector.broadcast %56 : vector<1x1x64xf32> to vector<2x8x64xf32>
    %58 = arith.mulf %55, %57 : vector<2x8x64xf32>
    %cst_32 = arith.constant dense<0.000000e+00> : vector<2x8xf32>
    %59 = vector.multi_reduction <add>, %58, %cst_32 [2] : vector<2x8x64xf32> to vector<2x8xf32>
    %60 = math.exp %59 : vector<2x8xf32>
    %61 = arith.divf %60, %5 : vector<2x8xf32>
    %62 = arith.addf %5, %60 : vector<2x8xf32>
    %63 = arith.mulf %61, %4 : vector<2x8xf32>
    %cst_33 = arith.constant dense<0.000000e+00> : vector<2xf32>
    %64 = vector.multi_reduction <add>, %63, %cst_33 [1] : vector<2x8xf32> to vector<2xf32>
    %65 = vector.shape_cast %64 : vector<2xf32> to vector<2x1xf32>
    %66 = tpu.reciprocal %65 : vector<2x1xf32> -> vector<2x1xf32>
    %67 = vector.broadcast %66 : vector<2x1xf32> to vector<2x8xf32>
    %68 = arith.mulf %63, %67 : vector<2x8xf32>
    %69 = vector.shape_cast %68 : vector<2x8xf32> to vector<2x8x1xf32>
    %70 = vector.broadcast %69 : vector<2x8x1xf32> to vector<2x8x64xf32>
    %71 = arith.mulf %70, %45 : vector<2x8x64xf32>
    %cst_34 = arith.constant dense<0.000000e+00> : vector<2x64xf32>
    %72 = vector.multi_reduction <add>, %71, %cst_34 [1] : vector<2x8x64xf32> to vector<2x64xf32>
    %c0_35 = arith.constant 0 : index
    %c0_36 = arith.constant 0 : index
    %c0_37 = arith.constant 0 : index
    %73 = vector.load %arg2[%c0_35, %c0_36, %c0_37] : memref<2x8x32xf32, #tpu.memory_space<vmem>>, vector<2x8x32xf32>
    %74 = vector.shape_cast %73 : vector<2x8x32xf32> to vector<16x32xf32>
    %cst_38 = arith.constant dense<0.000000e+00> : vector<16x32xf32>
    %75 = tpu.matmul %74, %11, %cst_38 {dimension_numbers = #tpu.dot_dimension_numbers<[1], [0], [0], [1], [0, 0, 1, 1], [], []>} : vector<16x32xf32>, vector<32x32xf32>, vector<16x32xf32> -> vector<16x32xf32>
    %76 = vector.shape_cast %75 : vector<16x32xf32> to vector<2x8x32xf32>
    %cst_39 = arith.constant dense<0.000000e+00> : vector<2x32xf32>
    %77 = tpu.matmul %43, %12, %cst_39 {dimension_numbers = #tpu.dot_dimension_numbers<[1], [0], [0], [1], [0, 0, 1, 1], [], []>} : vector<2x32xf32>, vector<32x32xf32>, vector<2x32xf32> -> vector<2x32xf32>
    %78 = vector.broadcast %18 : vector<1x32xf32> to vector<2x32xf32>
    %79 = arith.addf %77, %78 : vector<2x32xf32>
    %80 = vector.shape_cast %79 : vector<2x32xf32> to vector<2x1x32xf32>
    %81 = vector.broadcast %80 : vector<2x1x32xf32> to vector<2x8x32xf32>
    %82 = arith.addf %76, %81 : vector<2x8x32xf32>
    %83 = math.tanh %82 : vector<2x8x32xf32>
    %84 = vector.shape_cast %19 : vector<1x32xf32> to vector<1x1x32xf32>
    %85 = vector.broadcast %84 : vector<1x1x32xf32> to vector<2x8x32xf32>
    %86 = arith.mulf %83, %85 : vector<2x8x32xf32>
    %cst_40 = arith.constant dense<0.000000e+00> : vector<2x8xf32>
    %87 = vector.multi_reduction <add>, %86, %cst_40 [2] : vector<2x8x32xf32> to vector<2x8xf32>
    %cst_41 = arith.constant dense<0xFF800000> : vector<2xf32>
    %88 = vector.multi_reduction <maximumf>, %87, %cst_41 [1] : vector<2x8xf32> to vector<2xf32>
    %89 = vector.shape_cast %88 : vector<2xf32> to vector<2x1xf32>
    %90 = vector.broadcast %89 : vector<2x1xf32> to vector<2x8xf32>
    %91 = arith.subf %87, %90 : vector<2x8xf32>
    %92 = tpu.iota {dimensions = array<i32: 1>} : vector<2x8xi32>
    %c4_i32 = arith.constant 4 : i32
    %93 = vector.broadcast %c4_i32 : i32 to vector<2x8xi32>
    %94 = arith.cmpi slt, %92, %93 : vector<2x8xi32>
    %95 = arith.extui %94 : vector<2x8xi1> to vector<2x8xi32>
    %96 = arith.sitofp %95 : vector<2x8xi32> to vector<2x8xf32>
    %97 = math.exp %91 : vector<2x8xf32>
    %98 = arith.mulf %97, %96 : vector<2x8xf32>
    %cst_42 = arith.constant dense<0.000000e+00> : vector<2xf32>
    %99 = vector.multi_reduction <add>, %98, %cst_42 [1] : vector<2x8xf32> to vector<2xf32>
    %100 = vector.shape_cast %99 : vector<2xf32> to vector<2x1xf32>
    %101 = tpu.reciprocal %100 {approx = true} : vector<2x1xf32> -> vector<2x1xf32>
    %102 = vector.broadcast %101 : vector<2x1xf32> to vector<2x8xf32>
    %103 = arith.mulf %98, %102 : vector<2x8xf32>
    %104 = vector.shape_cast %103 : vector<2x8xf32> to vector<2x8x1xf32>
    %105 = vector.broadcast %104 : vector<2x8x1xf32> to vector<2x8x32xf32>
    %106 = arith.mulf %105, %73 : vector<2x8x32xf32>
    %cst_43 = arith.constant dense<0.000000e+00> : vector<2x32xf32>
    %107 = vector.multi_reduction <add>, %106, %cst_43 [1] : vector<2x8x32xf32> to vector<2x32xf32>
    %108 = tpu.concatenate %43, %72, %107, %41, %23 in 1 : vector<2x32xf32>, vector<2x64xf32>, vector<2x32xf32>, vector<2x32xf32>, vector<2x32xf32> -> vector<2x192xf32>
    %c0_44 = arith.constant 0 : index
    %c0_45 = arith.constant 0 : index
    %109 = vector.load %arg6[%c0_44, %c0_45] : memref<192x33xf32, #tpu.memory_space<vmem>>, vector<192x33xf32>
    %cst_46 = arith.constant dense<0.000000e+00> : vector<2x33xf32>
    %110 = tpu.matmul %108, %109, %cst_46 {dimension_numbers = #tpu.dot_dimension_numbers<[1], [0], [0], [1], [0, 0, 1, 1], [], []>} : vector<2x192xf32>, vector<192x33xf32>, vector<2x33xf32> -> vector<2x33xf32>
    %111 = vector.broadcast %20 : vector<1x33xf32> to vector<2x33xf32>
    %112 = arith.addf %110, %111 : vector<2x33xf32>
    %113 = vector.extract_strided_slice %112 {offsets = [0, 0], sizes = [2, 32], strides = [1, 1]} : vector<2x33xf32> to vector<2x32xf32>
    %114 = vector.extract_strided_slice %112 {offsets = [0, 32], sizes = [2, 1], strides = [1, 1]} : vector<2x33xf32> to vector<2x1xf32>
    %115 = arith.negf %114 : vector<2x1xf32>
    %116 = math.exp %115 : vector<2x1xf32>
    %cst_47 = arith.constant 1.000000e+00 : f32
    %117 = vector.broadcast %cst_47 : f32 to vector<2x1xf32>
    %118 = arith.addf %117, %116 : vector<2x1xf32>
    %119 = arith.divf %117, %118 : vector<2x1xf32>
    %cst_48 = arith.constant dense<0.000000e+00> : vector<2x128xf32>
    %120 = tpu.matmul %113, %7, %cst_48 {dimension_numbers = #tpu.dot_dimension_numbers<[1], [0], [0], [1], [0, 0, 1, 1], [], []>} : vector<2x32xf32>, vector<32x128xf32>, vector<2x128xf32> -> vector<2x128xf32>
    %121 = vector.broadcast %14 : vector<1x128xf32> to vector<2x128xf32>
    %122 = arith.addf %120, %121 : vector<2x128xf32>
    %cst_49 = arith.constant dense<0xFF800000> : vector<2xf32>
    %123 = vector.multi_reduction <maximumf>, %122, %cst_49 [1] : vector<2x128xf32> to vector<2xf32>
    %124 = vector.shape_cast %123 : vector<2xf32> to vector<2x1xf32>
    %125 = vector.broadcast %124 : vector<2x1xf32> to vector<2x128xf32>
    %126 = arith.subf %122, %125 : vector<2x128xf32>
    %127 = math.exp %126 : vector<2x128xf32>
    %cst_50 = arith.constant dense<0.000000e+00> : vector<2xf32>
    %128 = vector.multi_reduction <add>, %127, %cst_50 [1] : vector<2x128xf32> to vector<2xf32>
    %129 = vector.shape_cast %128 : vector<2xf32> to vector<2x1xf32>
    %130 = tpu.reciprocal %129 {approx = true} : vector<2x1xf32> -> vector<2x1xf32>
    %131 = vector.broadcast %130 : vector<2x1xf32> to vector<2x128xf32>
    %132 = arith.mulf %127, %131 : vector<2x128xf32>
    %133 = vector.broadcast %119 : vector<2x1xf32> to vector<2x128xf32>
    %134 = arith.mulf %133, %132 : vector<2x128xf32>
    %cst_51 = arith.constant 1.000000e+00 : f32
    %135 = vector.broadcast %cst_51 : f32 to vector<2x1xf32>
    %136 = arith.subf %135, %119 : vector<2x1xf32>
    %137 = vector.broadcast %136 : vector<2x1xf32> to vector<2x8xf32>
    %138 = arith.mulf %137, %68 : vector<2x8xf32>
    %c0_52 = arith.constant 0 : index
    %c0_53 = arith.constant 0 : index
    %139 = vector.load %arg3[%c0_52, %c0_53] : memref<2x8xi32, #tpu.memory_space<vmem>>, vector<2x8xi32>
    %140 = tpu.iota {dimensions = array<i32: 2>} : vector<2x8x144xi32>
    %141 = vector.shape_cast %139 : vector<2x8xi32> to vector<2x8x1xi32>
    %142 = vector.broadcast %141 : vector<2x8x1xi32> to vector<2x8x144xi32>
    %143 = arith.cmpi eq, %140, %142 : vector<2x8x144xi32>
    %144 = arith.extui %143 : vector<2x8x144xi1> to vector<2x8x144xi32>
    %145 = arith.sitofp %144 : vector<2x8x144xi32> to vector<2x8x144xf32>
    %146 = vector.shape_cast %138 : vector<2x8xf32> to vector<2x8x1xf32>
    %147 = vector.broadcast %146 : vector<2x8x1xf32> to vector<2x8x144xf32>
    %148 = arith.mulf %147, %145 : vector<2x8x144xf32>
    %cst_54 = arith.constant dense<0.000000e+00> : vector<2x144xf32>
    %149 = vector.multi_reduction <add>, %148, %cst_54 [1] : vector<2x8x144xf32> to vector<2x144xf32>
    %cst_55 = arith.constant 0.000000e+00 : f32
    %150 = vector.broadcast %cst_55 : f32 to vector<2x16xf32>
    %151 = tpu.concatenate %134, %150 in 1 : vector<2x128xf32>, vector<2x16xf32> -> vector<2x144xf32>
    %152 = arith.addf %151, %149 : vector<2x144xf32>
    %cst_56 = arith.constant 0.000000e+00 : f32
    %153 = vector.broadcast %cst_56 : f32 to vector<2x104xf32>
    %154 = tpu.concatenate %152, %43, %41, %72, %62, %153 in 1 : vector<2x144xf32>, vector<2x32xf32>, vector<2x32xf32>, vector<2x64xf32>, vector<2x8xf32>, vector<2x104xf32> -> vector<2x384xf32>
    %c0_57 = arith.constant 0 : index
    %c0_58 = arith.constant 0 : index
    %155 = vector.load %arg8[%c0_57, %c0_58] : memref<2x384xf32, #tpu.memory_space<vmem>>, vector<2x384xf32>
    tpu.vector_store %arg8[%c0_57, %c0_58], %154 {strides = array<i32>} : memref<2x384xf32, #tpu.memory_space<vmem>>, vector<2x384xf32>,
    return
  }
}

</mosaic_0001>

<llo_original>
// kernel: tpu_custom_call.1
$region0: #{tpu_custom_call.1}
  #allocation0 [shape = 'u32[]', space=smem, size = 0x4, offset = 0x4, fixed_abs, tag = 'smem constant byte address 0x4 - core index']
  #allocation1 [shape = 'u32[72,128]{1,0:T(1,128)}', space=vmem, size = 0x9000, scoped, tag = 'internal scratch']
  %s0 = inlined_call_operand.vmem [shape: f32[2,176], index: 0, kind: input, shape index: {}]
  %s1 = inlined_call_operand.vmem [shape: f32[2,8,64], index: 1, kind: input, shape index: {}]
  %s2 = inlined_call_operand.hbm [shape: f32[2,8,32], index: 2, kind: input, shape index: {}]
  %s3 = inlined_call_operand.hbm [shape: s32[2,8], index: 3, kind: input, shape index: {}]
  %s4 = inlined_call_operand.vmem [shape: f32[96,128], index: 4, kind: input, shape index: {}]
  %s5 = inlined_call_operand.vmem [shape: f32[160,128], index: 5, kind: input, shape index: {}]
  %s6 = inlined_call_operand.vmem [shape: f32[192,33], index: 6, kind: input, shape index: {}]
  %s7 = inlined_call_operand.hbm [shape: f32[5,128], index: 7, kind: input, shape index: {}]
  %s8 = inlined_call_operand.hbm [shape: f32[2,384], index: 8, kind: output, shape index: {}]
  %s9 = sld [smem:[#allocation0]]
  $region54: #{tpu_custom_call.1} parent=0
    _
  %s11 = ssub.s32 1, %s9
  %s12 = scalar_select 0, %s11, %s9
  $region1: #{tpu_custom_call.1} parent=0
    #allocation2 [shape = 'u8[8192]{0}', space=vmem, size = 0x2000, scoped, tag = 'input window, operand 2, single buffered']
    #allocation3 [shape = 's32[1]{0}', space=sflag, size = 0x4, scoped, tag = 'scoped memory for tpu_custom_call.1']
    #allocation4 [shape = 's32[1]{0}', space=sflag, size = 0x4, scoped, tag = 'scoped memory for tpu_custom_call.1']
    #allocation5 [shape = 'u8[1024]{0}', space=vmem, size = 0x400, scoped, tag = 'input window, operand 3, single buffered']
    #allocation6 [shape = 's32[1]{0}', space=sflag, size = 0x4, scoped, tag = 'scoped memory for tpu_custom_call.1']
    #allocation7 [shape = 'u8[4096]{0}', space=vmem, size = 0x1000, scoped, tag = 'input window, operand 7, single buffered']
    #allocation8 [shape = 'u8[3072]{0}', space=vmem, size = 0xc00, scoped, tag = 'output window, operand 0, single buffered']
    %13 = vsyncpa [#allocation3], 0
    %14 = vsyncpa [#allocation6], 0
    %15 = vsyncpa [#allocation4], 0
    // Predicated region
    $region2: #{tpu_custom_call.1} parent=1 // pred_check
      _
    $region3: #{tpu_custom_call.1} parent=1 // pred_check_branch
      %17 = sbr.rel (0) target = $region5
    $region4: #{tpu_custom_call.1} parent=1 // pred_region
      _
    $region5: #{tpu_custom_call.1} parent=1 // pred_fallthru
      _
    // Predicated region
    $region6: #{tpu_custom_call.1} parent=1 // pred_check
      _
    $region7: #{tpu_custom_call.1} parent=1 // pred_check_branch
      %19 = sbr.rel (0) target = $region9
    $region8: #{tpu_custom_call.1} parent=1 // pred_region
      _
    $region9: #{tpu_custom_call.1} parent=1 // pred_fallthru
      _
    // Predicated region
    $region10: #{tpu_custom_call.1} parent=1 // pred_check
      _
    $region11: #{tpu_custom_call.1} parent=1 // pred_check_branch
      %21 = sbr.rel (0) target = $region13
    $region12: #{tpu_custom_call.1} parent=1 // pred_region
      %23 = vsyncadd [#allocation3], 0
      %s24 = sshll.u32 %s2, 4
      %s25 = int_to_ptr.hbm [resolvable:$true] %s24
      %s26 = sshll.u32 [#allocation2], 4
      %s27 = int_to_ptr.vmem [resolvable:$true] %s26
      %32 = dma.hbm_to_vmem [thread:$0]  %s25, 256, %s27, [#allocation3], 128, 128, 8
    $region13: #{tpu_custom_call.1} parent=1 // pred_fallthru
      _
    // Predicated region
    $region14: #{tpu_custom_call.1} parent=1 // pred_check
      _
    $region15: #{tpu_custom_call.1} parent=1 // pred_check_branch
      %34 = sbr.rel (0) target = $region17
    $region16: #{tpu_custom_call.1} parent=1 // pred_region
      %36 = vsyncadd [#allocation6], 0
      %s38 = sshll.u32 %s3, 4
      %s39 = int_to_ptr.hbm [resolvable:$true] %s38
      %s40 = sshll.u32 [#allocation5], 4
      %s41 = int_to_ptr.vmem [resolvable:$true] %s40
      %43 = dma.hbm_to_vmem [thread:$0]  %s39, 32, %s41, [#allocation6]
    $region17: #{tpu_custom_call.1} parent=1 // pred_fallthru
      _
    // Predicated region
    $region18: #{tpu_custom_call.1} parent=1 // pred_check
      _
    $region19: #{tpu_custom_call.1} parent=1 // pred_check_branch
      %45 = sbr.rel (0) target = $region21
    $region20: #{tpu_custom_call.1} parent=1 // pred_region
      _
    $region21: #{tpu_custom_call.1} parent=1 // pred_fallthru
      _
    // Predicated region
    $region22: #{tpu_custom_call.1} parent=1 // pred_check
      _
    $region23: #{tpu_custom_call.1} parent=1 // pred_check_branch
      %47 = sbr.rel (0) target = $region25
    $region24: #{tpu_custom_call.1} parent=1 // pred_region
      _
    $region25: #{tpu_custom_call.1} parent=1 // pred_fallthru
      _
    // Predicated region
    $region26: #{tpu_custom_call.1} parent=1 // pred_check
      _
    $region27: #{tpu_custom_call.1} parent=1 // pred_check_branch
      %49 = sbr.rel (0) target = $region29
    $region28: #{tpu_custom_call.1} parent=1 // pred_region
      _
    $region29: #{tpu_custom_call.1} parent=1 // pred_fallthru
      _
    // Predicated region
    $region30: #{tpu_custom_call.1} parent=1 // pred_check
      _
    $region31: #{tpu_custom_call.1} parent=1 // pred_check_branch
      %51 = sbr.rel (0) target = $region33
    $region32: #{tpu_custom_call.1} parent=1 // pred_region
      %53 = vsyncadd [#allocation6], 0
      %s55 = sshll.u32 %s7, 4
      %s56 = int_to_ptr.hbm [resolvable:$true] %s55
      %s57 = sshll.u32 [#allocation7], 4
      %s58 = int_to_ptr.vmem [resolvable:$true] %s57
      %60 = dma.hbm_to_vmem [thread:$0]  %s56, 128, %s58, [#allocation6]
    $region33: #{tpu_custom_call.1} parent=1 // pred_fallthru
      _
    // Predicated region
    $region34: #{tpu_custom_call.1} parent=1 // pred_check
      _
    $region35: #{tpu_custom_call.1} parent=1 // pred_check_branch
      %62 = sbr.rel (0) target = $region37
    $region36: #{tpu_custom_call.1} parent=1 // pred_region
      %64 = dma.done [#allocation3], 256
    $region37: #{tpu_custom_call.1} parent=1 // pred_fallthru
      _
    // Predicated region
    $region38: #{tpu_custom_call.1} parent=1 // pred_check
      _
    $region39: #{tpu_custom_call.1} parent=1 // pred_check_branch
      %66 = sbr.rel (0) target = $region41
    $region40: #{tpu_custom_call.1} parent=1 // pred_region
      %68 = dma.done [#allocation6], 32
    $region41: #{tpu_custom_call.1} parent=1 // pred_fallthru
      _
    // Predicated region
    $region42: #{tpu_custom_call.1} parent=1 // pred_check
      _
    $region43: #{tpu_custom_call.1} parent=1 // pred_check_branch
      %70 = sbr.rel (0) target = $region45
    $region44: #{tpu_custom_call.1} parent=1 // pred_region
      %72 = dma.done [#allocation6], 128
    $region45: #{tpu_custom_call.1} parent=1 // pred_fallthru
      _
    %v73 = vld [vmem:[%s0] sm:$0xf]
    %v74 = vld [vmem:[%s4] sm:$0xff]
    %v75 = vld [vmem:[%s4 + $0x8] sm:$0xff]
    %v76 = vld [vmem:[%s4 + $0x10] sm:$0xff]
    %v77 = vld [vmem:[%s4 + $0x18] sm:$0xff]
    %v78 = vld [vmem:[%s4 + $0x20] sm:$0xff]
    %v79 = vld [vmem:[%s4 + $0x28] sm:$0xff]
    %v80 = vld [vmem:[%s4 + $0x30] sm:$0xff]
    %v81 = vld [vmem:[%s4 + $0x38] sm:$0xff]
    %v82 = vld [vmem:[%s4 + $0x40] sm:$0xff]
    %v83 = vld [vmem:[%s4 + $0x48] sm:$0xff]
    %v84 = vld [vmem:[%s4 + $0x50] sm:$0xff]
    %v85 = vld [vmem:[%s4 + $0x58] sm:$0xff]
    %v86 = vld [vmem:[%s5] sm:$0xff]
    %v87 = vld [vmem:[%s5 + $0x8] sm:$0xff]
    %v88 = vld [vmem:[%s5 + $0x10] sm:$0xff]
    %v89 = vld [vmem:[%s5 + $0x18] sm:$0xff]
    %v90 = vld [vmem:[%s5 + $0x20] sm:$0xff]
    %v91 = vld [vmem:[%s5 + $0x28] sm:$0xff]
    %v92 = vld [vmem:[%s5 + $0x30] sm:$0xff]
    %v93 = vld [vmem:[%s5 + $0x38] sm:$0xff]
    %v94 = vld [vmem:[%s5 + $0x40] sm:$0xff]
    %v95 = vld [vmem:[%s5 + $0x48] sm:$0xff]
    %v96 = vld [vmem:[%s5 + $0x50] sm:$0xff]
    %v97 = vld [vmem:[%s5 + $0x58] sm:$0xff]
    %v98 = vld [vmem:[%s5 + $0x60] sm:$0xff]
    %v99 = vld [vmem:[%s5 + $0x68] sm:$0xff]
    %v100 = vld [vmem:[%s5 + $0x70] sm:$0xff]
    %v101 = vld [vmem:[%s5 + $0x78] sm:$0xff]
    %v102 = vld [vmem:[%s5 + $0x80] sm:$0xff]
    %v103 = vld [vmem:[%s5 + $0x88] sm:$0xff]
    %v104 = vld [vmem:[%s5 + $0x90] sm:$0xff]
    %v105 = vld [vmem:[%s5 + $0x98] sm:$0xff]
    %v106 = vld [vmem:[%s5 + $0x40] sm:$0xff]
    %v107 = vld [vmem:[%s5 + $0x48] sm:$0xff]
    %v108 = vld [vmem:[%s5 + $0x50] sm:$0xff]
    %v109 = vld [vmem:[%s5 + $0x58] sm:$0xff]
    %v110 = vld [vmem:[#allocation7] sm:$0x1]
    %v111 = vld [vmem:[#allocation7 + $0x1] sm:$0x1]
    %v112 = vld [vmem:[#allocation7 + $0x2] sm:$0x1]
    %v113 = vld [vmem:[#allocation7 + $0x3] sm:$0x1]
    %v114 = vld [vmem:[#allocation7 + $0x4] sm:$0x1]
    %v115 = vperm.slane %v113, 0
    %vm116 = vcmask 785408
    %v118 = vsel %vm116, %v73, 0
    %120 = vmatpush.msra.mxu0 0.0
    %121 = vmatpush.msra.mxu0 0.0
    %122 = vmatpush.msra.mxu0 0.0
    %123 = vmatpush.msra.mxu0 0.0
    %124 = vmatpush.msra.mxu0 %v105
    %125 = vmatpush.msra.mxu0 %v104
    %126 = vmatpush.msra.mxu0 %v103
    %127 = vmatpush.msra.mxu0 %v102
    %128 = vmatpush.msra.mxu0 %v101
    %129 = vmatpush.msra.mxu0 %v100
    %130 = vmatpush.msra.mxu0 %v99
    %131 = vmatpush.msra.mxu0 %v98
    %132 = vmatpush.msra.mxu0 %v97
    %133 = vmatpush.msra.mxu0 %v96
    %134 = vmatpush.msra.mxu0 %v95
    %135 = vmatpush.msra.mxu0 %v94
    %136 = vmatmul.f32.gmra.mxu0 %v118
    %v137 = vpop.f32.mrf.mxu0
    %v138 = vadd.f32 %v115, %v137
    %139 = vdwg.mxu0
    %140 = vst [vmem:[#allocation1] ss:$4 sm:$0xff] %v73
    %v141 = vld.sshfl [vmem:[#allocation1] sm:$0xff pattern:$0x73625140]
    %142 = vrot.lane.b32.xlu0 %v141, 64
    %v143 = vpop.permute.xlu0 %142
    %vm145 = vcmask 261120
    %v146 = vsel %vm145, %v138, %v143
    %v147 = vperm.slane %v110, 0
    %vm148 = vcmask 523264
    %v150 = vsel %vm148, %v146, 0
    %152 = vmatpush.msra.mxu0 0.0
    %153 = vmatpush.msra.mxu0 0.0
    %154 = vmatpush.msra.mxu0 0.0
    %155 = vmatpush.msra.mxu0 0.0
    %156 = vmatpush.msra.mxu0 0.0
    %157 = vmatpush.msra.mxu0 0.0
    %158 = vmatpush.msra.mxu0 0.0
    %159 = vmatpush.msra.mxu0 0.0
    %160 = vmatpush.msra.mxu0 %v81
    %161 = vmatpush.msra.mxu0 %v80
    %162 = vmatpush.msra.mxu0 %v79
    %163 = vmatpush.msra.mxu0 %v78
    %164 = vmatpush.msra.mxu0 %v77
    %165 = vmatpush.msra.mxu0 %v76
    %166 = vmatpush.msra.mxu0 %v75
    %167 = vmatpush.msra.mxu0 %v74
    %168 = vmatmul.f32.gmra.mxu0 %v150
    %v169 = vpop.f32.mrf.mxu0
    %v170 = vadd.f32 %v147, %v169
    %171 = vdwg.mxu0
    %v172 = vxor.u32 %v170, 2147483648
    %v173 = vmul.f32 %v172, 1.442695
    %v174 = vpow.pop %v173
    %v175 = vadd.f32 %v174, 1.0
    %v176 = vrcp.pop %v175
    %v177 = vmul.f32 %v175, %v176
    %v178 = vsub.f32 1.0, %v177
    %v179 = vmul.f32 %v176, %v178
    %v180 = vadd.f32 %v176, %v179
    %vm181 = vweird.f32 %v175
    %vm182 = vweird.f32 %v176
    %vm183 = vmor %vm181, %vm182
    %v184 = vsel %vm183, %v176, %v180
    %v185 = vand.u32 2147483647, %v175
    %vm186 = vcmp.eq.f32.partialorder %v185, 8.507059e+37
    %v187 = vand.u32 %v175, 2147483648
    %v188 = vor.u32 1.1754944e-38, %v187
    %v189 = vsel %vm186, %v188, %v184
    %v190 = vmul.f32 1.0, %v189
    %v191 = vtanh.pop %v170
    %192 = vst [vmem:[#allocation1] ss:$4 sm:$0xff] %v73
    %v193 = vld.sshfl [vmem:[#allocation1 + $0x8] sm:$0xff pattern:$0x73625140]
    %194 = vrot.lane.b32.xlu0 %v193, 32
    %v195 = vpop.permute.xlu0 %194
    %v197 = vmul.f32 %v190, %v195
    %199 = vrot.lane.b32.xlu0 %v191, 32
    %v200 = vpop.permute.xlu0 %199
    %v202 = vmul.f32 %v190, %v200
    %204 = vrot.lane.b32.xlu0 %v202, 32
    %v205 = vpop.permute.xlu0 %204
    %v207 = vadd.f32 %v197, %v205
    %v208 = vtanh.pop %v207
    %210 = vrot.lane.b32.xlu0 %v208, 32
    %v211 = vpop.permute.xlu0 %210
    %v213 = vmul.f32 %v190, %v211
    %215 = vrot.lane.b32.xlu0 %v213, 64
    %v216 = vpop.permute.xlu0 %215
    %v218 = vsel %vm145, %v216, %v207
    %v219 = vld [vmem:[%s1] sm:$0xff]
    %v220 = vld [vmem:[%s1 + $0x8] sm:$0xff]
    %v222 = vsel %vm148, %v219, 0
    %v225 = vsel %vm148, %v220, 0
    %227 = vmatpush.msra.mxu0 0.0
    %228 = vmatpush.msra.mxu0 0.0
    %229 = vmatpush.msra.mxu0 0.0
    %230 = vmatpush.msra.mxu0 0.0
    %231 = vmatpush.msra.mxu0 0.0
    %232 = vmatpush.msra.mxu0 0.0
    %233 = vmatpush.msra.mxu0 0.0
    %234 = vmatpush.msra.mxu0 0.0
    %235 = vmatpush.msra.mxu0 %v93
    %236 = vmatpush.msra.mxu0 %v92
    %237 = vmatpush.msra.mxu0 %v91
    %238 = vmatpush.msra.mxu0 %v90
    %239 = vmatpush.msra.mxu0 %v89
    %240 = vmatpush.msra.mxu0 %v88
    %241 = vmatpush.msra.mxu0 %v87
    %242 = vmatpush.msra.mxu0 %v86
    %243 = vmatmul.f32.gmra.mxu0 %v222
    %v244 = vpop.f32.mrf.mxu0
    %v245 = vadd.f32 0.0, %v244
    %246 = vmatmul.f32.gmra.mxu0 %v225
    %v247 = vpop.f32.mrf.mxu0
    %v248 = vadd.f32 0.0, %v247
    %249 = vdwg.mxu0
    %v250 = vperm.slane %v112, 0
    %259 = vrot.lane.b32.xlu0 %v86, 64
    %v260 = vpop.permute.xlu0 %259
    %261 = vrot.lane.b32.xlu0 %v87, 64
    %v262 = vpop.permute.xlu0 %261
    %263 = vrot.lane.b32.xlu0 %v88, 64
    %v264 = vpop.permute.xlu0 %263
    %265 = vrot.lane.b32.xlu0 %v89, 64
    %v266 = vpop.permute.xlu0 %265
    %267 = vrot.lane.b32.xlu0 %v90, 64
    %v268 = vpop.permute.xlu0 %267
    %269 = vrot.lane.b32.xlu0 %v91, 64
    %v270 = vpop.permute.xlu0 %269
    %271 = vrot.lane.b32.xlu0 %v92, 64
    %v272 = vpop.permute.xlu0 %271
    %273 = vrot.lane.b32.xlu0 %v93, 64
    %v274 = vpop.permute.xlu0 %273
    %v284 = vsel %vm148, %v218, 0
    %286 = vmatpush.msra.mxu0 0.0
    %287 = vmatpush.msra.mxu0 0.0
    %288 = vmatpush.msra.mxu0 0.0
    %289 = vmatpush.msra.mxu0 0.0
    %290 = vmatpush.msra.mxu0 0.0
    %291 = vmatpush.msra.mxu0 0.0
    %292 = vmatpush.msra.mxu0 0.0
    %293 = vmatpush.msra.mxu0 0.0
    %294 = vmatpush.msra.mxu0 %v274
    %295 = vmatpush.msra.mxu0 %v272
    %296 = vmatpush.msra.mxu0 %v270
    %297 = vmatpush.msra.mxu0 %v268
    %298 = vmatpush.msra.mxu0 %v266
    %299 = vmatpush.msra.mxu0 %v264
    %300 = vmatpush.msra.mxu0 %v262
    %301 = vmatpush.msra.mxu0 %v260
    %302 = vmatmul.f32.gmra.mxu0 %v284
    %v303 = vpop.f32.mrf.mxu0
    %v304 = vadd.f32 %v250, %v303
    %305 = vdwg.mxu0
    %v307 = vrot.slane %v304, 1
    %v308 = vperm.slane %v304, 0
    %v309 = vperm.slane %v307, 0
    %v312 = vadd.f32 %v245, %v308
    %v313 = vadd.f32 %v248, %v309
    %v314 = vtanh.pop %v312
    %v315 = vtanh.pop %v313
    %317 = vrot.lane.b32.xlu0 %v250, 64
    %v318 = vpop.permute.xlu0 %317
    %v320 = vmul.f32 %v314, %v318
    %v321 = vmul.f32 %v315, %v318
    %v322 = vsel %vm148, %v320, 0.0
    %323 = vadd.xlane.f32.xlu0 %v322
    %v324 = vpop.xlane.xlu0 %323
    %v325 = vsel %vm148, %v321, 0.0
    %326 = vadd.xlane.f32.xlu0 %v325
    %v327 = vpop.xlane.xlu0 %326
    %v328 = vmul.f32 %v324, 1.442695
    %v329 = vpow.pop %v328
    %v330 = vmul.f32 %v327, 1.442695
    %v331 = vpow.pop %v330
    %332 = vst [vmem:[#allocation1] ss:$4 sm:$0xff] %v73
    %v333 = vld.sshfl [vmem:[#allocation1 + $0x8] sm:$0xff pattern:$0x73625140]
    %v334 = vperm.slane %v333, 0
    %v335 = vlaneseq
    %v336 = vshrl.u32 %v335, 7
    %v337 = vadd.s32 %v336, 40
    %338 = vset.pattern.permute.xlu0 %v337
    %339 = vperm.xlu0 %338, %v334
    %v340 = vpop.permute.xlu0 %339
    %v341 = vperm.slane %v333, 1
    %v342 = vlaneseq
    %v343 = vshrl.u32 %v342, 7
    %v344 = vadd.s32 %v343, 40
    %345 = vset.pattern.permute.xlu0 %v344
    %346 = vperm.xlu0 %345, %v341
    %v347 = vpop.permute.xlu0 %346
    %v350 = vrcp.pop %v340
    %v351 = vmul.f32 %v340, %v350
    %v352 = vsub.f32 1.0, %v351
    %v353 = vmul.f32 %v350, %v352
    %v354 = vadd.f32 %v350, %v353
    %vm355 = vweird.f32 %v340
    %vm356 = vweird.f32 %v350
    %vm357 = vmor %vm355, %vm356
    %v358 = vsel %vm357, %v350, %v354
    %v359 = vand.u32 2147483647, %v340
    %vm360 = vcmp.eq.f32.partialorder %v359, 8.507059e+37
    %v361 = vand.u32 %v340, 2147483648
    %v362 = vor.u32 1.1754944e-38, %v361
    %v363 = vsel %vm360, %v362, %v358
    %v364 = vmul.f32 %v329, %v363
    %v365 = vrcp.pop %v347
    %v366 = vmul.f32 %v347, %v365
    %v367 = vsub.f32 1.0, %v366
    %v368 = vmul.f32 %v365, %v367
    %v369 = vadd.f32 %v365, %v368
    %vm370 = vweird.f32 %v347
    %vm371 = vweird.f32 %v365
    %vm372 = vmor %vm370, %vm371
    %v373 = vsel %vm372, %v365, %v369
    %v374 = vand.u32 2147483647, %v347
    %vm375 = vcmp.eq.f32.partialorder %v374, 8.507059e+37
    %v376 = vand.u32 %v347, 2147483648
    %v377 = vor.u32 1.1754944e-38, %v376
    %v378 = vsel %vm375, %v377, %v373
    %v379 = vmul.f32 %v331, %v378
    %380 = vrot.lane.b32.xlu0 %v73, 88
    %v381 = vpop.permute.xlu0 %380
    %v382 = vrot.slane %v381, 2
    %v387 = vunpack.c.l.s4 269488144
    %v388 = vunpack.c.0.s8 %v387
    %v389 = vperm.slane %v329, %v388
    %v391 = vunpack.c.l.s4 842150450
    %v392 = vunpack.c.0.s8 %v391
    %v393 = vperm.slane %v329, %v392
    %v395 = vunpack.c.l.s4 1414812756
    %v396 = vunpack.c.0.s8 %v395
    %v397 = vperm.slane %v329, %v396
    %v399 = vunpack.c.l.s4 1987475062
    %v400 = vunpack.c.0.s8 %v399
    %v401 = vperm.slane %v329, %v400
    %v403 = vunpack.c.l.s4 269488144
    %v404 = vunpack.c.0.s8 %v403
    %v405 = vperm.slane %v331, %v404
    %v407 = vunpack.c.l.s4 842150450
    %v408 = vunpack.c.0.s8 %v407
    %v409 = vperm.slane %v331, %v408
    %v411 = vunpack.c.l.s4 1414812756
    %v412 = vunpack.c.0.s8 %v411
    %v413 = vperm.slane %v331, %v412
    %v415 = vunpack.c.l.s4 1987475062
    %v416 = vunpack.c.0.s8 %v415
    %v417 = vperm.slane %v331, %v416
    %418 = vst [vmem:[#allocation1] ss:$4 sm:$0xff] %v389
    %s419 = scalar_lea.vmem [#allocation1], 1
    %420 = vst [vmem:[%s419] ss:$4 sm:$0xff] %v393
    %s421 = scalar_lea.vmem [#allocation1], 2
    %422 = vst [vmem:[%s421] ss:$4 sm:$0xff] %v397
    %s423 = scalar_lea.vmem [#allocation1], 3
    %424 = vst [vmem:[%s423] ss:$4 sm:$0xff] %v401
    %v425 = vld.sshfl [vmem:[#allocation1] sm:$0xff pattern:$0x73625140]
    %s426 = scalar_lea.vmem [#allocation1], 32
    %427 = vst [vmem:[%s426] ss:$4 sm:$0xff] %v405
    %s428 = scalar_lea.vmem [#allocation1], 33
    %429 = vst [vmem:[%s428] ss:$4 sm:$0xff] %v409
    %s430 = scalar_lea.vmem [#allocation1], 34
    %431 = vst [vmem:[%s430] ss:$4 sm:$0xff] %v413
    %s432 = scalar_lea.vmem [#allocation1], 35
    %433 = vst [vmem:[%s432] ss:$4 sm:$0xff] %v417
    %v434 = vld.sshfl [vmem:[#allocation1 + $0x20] sm:$0xff pattern:$0x73625140]
    %435 = vset.pattern.permute.xlu0 0
    %436 = vperm.xlu0 %435, %v425
    %v437 = vpop.permute.xlu0 %436
    %438 = vset.pattern.permute.xlu0 0
    %439 = vperm.xlu0 %438, %v434
    %v440 = vpop.permute.xlu0 %439
    %v441 = vlaneseq
    %v442 = vand.u32 %v441, 127
    %v443 = vperm.slane %v437, %v442
    %v444 = vperm.slane %v440, %v442
    %vm445 = vcmask 1041409
    %v446 = vsel %vm445, %v444, %v443
    %v448 = vadd.f32 %v382, %v446
    %449 = vst [vmem:[#allocation1] ss:$4 sm:$0xff] %v73
    %v450 = vld.sshfl [vmem:[#allocation1 + $0x8] sm:$0xff pattern:$0x73625140]
    %v451 = vperm.slane %v450, 0
    %v452 = vlaneseq
    %v453 = vshrl.u32 %v452, 7
    %v454 = vadd.s32 %v453, 32
    %455 = vset.pattern.permute.xlu0 %v454
    %456 = vperm.xlu0 %455, %v451
    %v457 = vpop.permute.xlu0 %456
    %v458 = vperm.slane %v450, 1
    %v459 = vlaneseq
    %v460 = vshrl.u32 %v459, 7
    %v461 = vadd.s32 %v460, 32
    %462 = vset.pattern.permute.xlu0 %v461
    %463 = vperm.xlu0 %462, %v458
    %v464 = vpop.permute.xlu0 %463
    %v467 = vmul.f32 %v364, %v457
    %v468 = vmul.f32 %v379, %v464
    %471 = vset.pattern.permute.xlu0 0
    %472 = vperm.xlu0 %471, %v467
    %v473 = vpop.permute.xlu0 %472
    %474 = vset.pattern.permute.xlu0 0
    %475 = vperm.xlu0 %474, %v468
    %v476 = vpop.permute.xlu0 %475
    %v477 = vperm.slane %v473, %v442
    %v478 = vperm.slane %v476, %v442
    %v479 = vsel %vm445, %v478, %v477
    %vm481 = vcmask 58368
    %v482 = vsel %vm481, %v479, 0.0
    %483 = vadd.xlane.f32.xlu0 %v482
    %v484 = vpop.xlane.xlu0 %483
    %v485 = vrcp.pop %v484
    %v486 = vmul.f32 %v484, %v485
    %v487 = vsub.f32 1.0, %v486
    %v488 = vmul.f32 %v485, %v487
    %v489 = vadd.f32 %v485, %v488
    %vm490 = vweird.f32 %v484
    %vm491 = vweird.f32 %v485
    %vm492 = vmor %vm490, %vm491
    %v493 = vsel %vm492, %v485, %v489
    %v494 = vand.u32 2147483647, %v484
    %vm495 = vcmp.eq.f32.partialorder %v494, 8.507059e+37
    %v496 = vand.u32 %v484, 2147483648
    %v497 = vor.u32 1.1754944e-38, %v496
    %v498 = vsel %vm495, %v497, %v493
    %v500 = vperm.slane %v498, 0
    %v501 = vperm.slane %v498, 1
    %v504 = vmul.f32 %v467, %v500
    %v505 = vmul.f32 %v468, %v501
    %507 = vset.pattern.permute.xlu0 0
    %508 = vperm.xlu0 %507, %v504
    %v509 = vpop.permute.xlu0 %508
    %512 = vset.pattern.permute.xlu0 0
    %513 = vperm.xlu0 %512, %v505
    %v514 = vpop.permute.xlu0 %513
    %v516 = vmul.f32 %v509, %v219
    %v517 = vmul.f32 %v514, %v220
    %v518 = vsel %vm148, %v516, 0.0
    %v519 = vrot.slane %v518, 4
    %v520 = vadd.f32 %v518, %v519
    %v521 = vrot.slane %v520, 2
    %v522 = vadd.f32 %v520, %v521
    %v523 = vrot.slane %v522, 1
    %v524 = vadd.f32 %v522, %v523
    %v525 = vsel %vm148, %v517, 0.0
    %v526 = vrot.slane %v525, 4
    %v527 = vadd.f32 %v525, %v526
    %v528 = vrot.slane %v527, 2
    %v529 = vadd.f32 %v527, %v528
    %v530 = vrot.slane %v529, 1
    %v531 = vadd.f32 %v529, %v530
    %v532 = vld [vmem:[#allocation2] sm:$0xff]
    %v533 = vld [vmem:[#allocation2 + $0x8] sm:$0xff]
    %538 = vrot.lane.b32.xlu0 %v106, 96
    %v539 = vpop.permute.xlu0 %538
    %540 = vrot.lane.b32.xlu0 %v107, 96
    %v541 = vpop.permute.xlu0 %540
    %542 = vrot.lane.b32.xlu0 %v108, 96
    %v543 = vpop.permute.xlu0 %542
    %544 = vrot.lane.b32.xlu0 %v109, 96
    %v545 = vpop.permute.xlu0 %544
    %v551 = vsel %vm145, %v532, 0
    %v554 = vsel %vm145, %v533, 0
    %556 = vmatpush.msra.mxu0 0.0
    %557 = vmatpush.msra.mxu0 0.0
    %558 = vmatpush.msra.mxu0 0.0
    %559 = vmatpush.msra.mxu0 0.0
    %560 = vmatpush.msra.mxu0 0.0
    %561 = vmatpush.msra.mxu0 0.0
    %562 = vmatpush.msra.mxu0 0.0
    %563 = vmatpush.msra.mxu0 0.0
    %564 = vmatpush.msra.mxu0 0.0
    %565 = vmatpush.msra.mxu0 0.0
    %566 = vmatpush.msra.mxu0 0.0
    %567 = vmatpush.msra.mxu0 0.0
    %568 = vmatpush.msra.mxu0 %v545
    %569 = vmatpush.msra.mxu0 %v543
    %570 = vmatpush.msra.mxu0 %v541
    %571 = vmatpush.msra.mxu0 %v539
    %572 = vmatmul.f32.gmra.mxu0 %v551
    %v573 = vpop.f32.mrf.mxu0
    %v574 = vadd.f32 0.0, %v573
    %575 = vmatmul.f32.gmra.mxu0 %v554
    %v576 = vpop.f32.mrf.mxu0
    %v577 = vadd.f32 0.0, %v576
    %578 = vdwg.mxu0
    %579 = vrot.lane.b32.xlu0 %v106, 64
    %v580 = vpop.permute.xlu0 %579
    %581 = vrot.lane.b32.xlu0 %v107, 64
    %v582 = vpop.permute.xlu0 %581
    %583 = vrot.lane.b32.xlu0 %v108, 64
    %v584 = vpop.permute.xlu0 %583
    %585 = vrot.lane.b32.xlu0 %v109, 64
    %v586 = vpop.permute.xlu0 %585
    %592 = vrot.lane.b32.xlu0 %v115, 96
    %v593 = vpop.permute.xlu0 %592
    %v595 = vsel %vm145, %v216, 0
    %597 = vmatpush.msra.mxu0 0.0
    %598 = vmatpush.msra.mxu0 0.0
    %599 = vmatpush.msra.mxu0 0.0
    %600 = vmatpush.msra.mxu0 0.0
    %601 = vmatpush.msra.mxu0 0.0
    %602 = vmatpush.msra.mxu0 0.0
    %603 = vmatpush.msra.mxu0 0.0
    %604 = vmatpush.msra.mxu0 0.0
    %605 = vmatpush.msra.mxu0 0.0
    %606 = vmatpush.msra.mxu0 0.0
    %607 = vmatpush.msra.mxu0 0.0
    %608 = vmatpush.msra.mxu0 0.0
    %609 = vmatpush.msra.mxu0 %v586
    %610 = vmatpush.msra.mxu0 %v584
    %611 = vmatpush.msra.mxu0 %v582
    %612 = vmatpush.msra.mxu0 %v580
    %613 = vmatmul.f32.gmra.mxu0 %v595
    %v614 = vpop.f32.mrf.mxu0
    %v615 = vadd.f32 %v593, %v614
    %616 = vdwg.mxu0
    %v618 = vrot.slane %v615, 1
    %v619 = vperm.slane %v615, 0
    %v620 = vperm.slane %v618, 0
    %v623 = vadd.f32 %v574, %v619
    %v624 = vadd.f32 %v577, %v620
    %v625 = vtanh.pop %v623
    %v626 = vtanh.pop %v624
    %627 = vrot.lane.b32.xlu0 %v115, 64
    %v628 = vpop.permute.xlu0 %627
    %v630 = vmul.f32 %v625, %v628
    %v631 = vmul.f32 %v626, %v628
    %v632 = vsel %vm145, %v630, 0.0
    %633 = vadd.xlane.f32.xlu0 %v632
    %v634 = vpop.xlane.xlu0 %633
    %v635 = vsel %vm145, %v631, 0.0
    %636 = vadd.xlane.f32.xlu0 %v635
    %v637 = vpop.xlane.xlu0 %636
    %v640 = vperm.slane %v634, %v442
    %v641 = vperm.slane %v637, %v442
    %v642 = vsel %vm445, %v641, %v640
    %v644 = vsel %vm481, %v642, -inf
    %645 = vmax.xlane.f32.xlu0 %v644
    %v646 = vpop.xlane.xlu0 %645
    %v648 = vperm.slane %v646, 0
    %v649 = vperm.slane %v646, 1
    %v652 = vsub.f32 %v634, %v648
    %v653 = vsub.f32 %v637, %v649
    %vm654 = vcmp.lt.s32.totalorder %v442, 4
    %v655 = vsel %vm654, 1, 0
    %v656 = vcvt.s32.f32 %v655
    %v657 = vmul.f32 %v652, 1.442695
    %v658 = vpow.pop %v657
    %v659 = vmul.f32 %v653, 1.442695
    %v660 = vpow.pop %v659
    %v662 = vlaneseq
    %v663 = vshrl.u32 %v662, 7
    %665 = vset.pattern.permute.xlu0 %v663
    %666 = vperm.xlu0 %665, %v656
    %v667 = vpop.permute.xlu0 %666
    %v669 = vmul.f32 %v658, %v667
    %v670 = vmul.f32 %v660, %v667
    %673 = vset.pattern.permute.xlu0 0
    %674 = vperm.xlu0 %673, %v669
    %v675 = vpop.permute.xlu0 %674
    %676 = vset.pattern.permute.xlu0 0
    %677 = vperm.xlu0 %676, %v670
    %v678 = vpop.permute.xlu0 %677
    %v679 = vperm.slane %v675, %v442
    %v680 = vperm.slane %v678, %v442
    %v681 = vsel %vm445, %v680, %v679
    %v683 = vsel %vm481, %v681, 0.0
    %684 = vadd.xlane.f32.xlu0 %v683
    %v685 = vpop.xlane.xlu0 %684
    %v686 = vrcp.pop %v685
    %v688 = vperm.slane %v686, 0
    %v689 = vperm.slane %v686, 1
    %v692 = vmul.f32 %v669, %v688
    %v693 = vmul.f32 %v670, %v689
    %695 = vset.pattern.permute.xlu0 0
    %696 = vperm.xlu0 %695, %v692
    %v697 = vpop.permute.xlu0 %696
    %700 = vset.pattern.permute.xlu0 0
    %701 = vperm.xlu0 %700, %v693
    %v702 = vpop.permute.xlu0 %701
    %v704 = vmul.f32 %v697, %v532
    %v705 = vmul.f32 %v702, %v533
    %v706 = vsel %vm145, %v704, 0.0
    %v707 = vrot.slane %v706, 4
    %v708 = vadd.f32 %v706, %v707
    %v709 = vrot.slane %v708, 2
    %v710 = vadd.f32 %v708, %v709
    %v711 = vrot.slane %v710, 1
    %v712 = vadd.f32 %v710, %v711
    %v713 = vsel %vm145, %v705, 0.0
    %v714 = vrot.slane %v713, 4
    %v715 = vadd.f32 %v713, %v714
    %v716 = vrot.slane %v715, 2
    %v717 = vadd.f32 %v715, %v716
    %v718 = vrot.slane %v717, 1
    %v719 = vadd.f32 %v717, %v718
    %v722 = vsel %vm445, %v531, %v524
    %723 = vrot.lane.b32.xlu0 %v722, 32
    %v724 = vpop.permute.xlu0 %723
    %v728 = vsel %vm445, %v719, %v712
    %729 = vrot.lane.b32.xlu0 %v728, 96
    %v730 = vpop.permute.xlu0 %729
    %733 = vrot.lane.b32.xlu0 %v207, 96
    %v734 = vpop.permute.xlu0 %733
    %737 = vrot.lane.b32.xlu0 %v138, 32
    %v738 = vpop.permute.xlu0 %737
    %v740 = vsel %vm145, %v216, %v724
    %v741 = vsel %vm116, %v740, %v730
    %v742 = vsel %vm145, %v734, %v738
    %v743 = vld [vmem:[%s6] sm:$0xff]
    %v744 = vld [vmem:[%s6 + $0x8] sm:$0xff]
    %v745 = vld [vmem:[%s6 + $0x10] sm:$0xff]
    %v746 = vld [vmem:[%s6 + $0x18] sm:$0xff]
    %v747 = vld [vmem:[%s6 + $0x20] sm:$0xff]
    %v748 = vld [vmem:[%s6 + $0x28] sm:$0xff]
    %v749 = vld [vmem:[%s6 + $0x30] sm:$0xff]
    %v750 = vld [vmem:[%s6 + $0x38] sm:$0xff]
    %v751 = vld [vmem:[%s6 + $0x40] sm:$0xff]
    %v752 = vld [vmem:[%s6 + $0x48] sm:$0xff]
    %v753 = vld [vmem:[%s6 + $0x50] sm:$0xff]
    %v754 = vld [vmem:[%s6 + $0x58] sm:$0xff]
    %v755 = vld [vmem:[%s6 + $0x60] sm:$0xff]
    %v756 = vld [vmem:[%s6 + $0x68] sm:$0xff]
    %v757 = vld [vmem:[%s6 + $0x70] sm:$0xff]
    %v758 = vld [vmem:[%s6 + $0x78] sm:$0xff]
    %v759 = vld [vmem:[%s6 + $0x80] sm:$0xff]
    %v760 = vld [vmem:[%s6 + $0x88] sm:$0xff]
    %v761 = vld [vmem:[%s6 + $0x90] sm:$0xff]
    %v762 = vld [vmem:[%s6 + $0x98] sm:$0xff]
    %v763 = vld [vmem:[%s6 + $0xa0] sm:$0xff]
    %v764 = vld [vmem:[%s6 + $0xa8] sm:$0xff]
    %v765 = vld [vmem:[%s6 + $0xb0] sm:$0xff]
    %v766 = vld [vmem:[%s6 + $0xb8] sm:$0xff]
    %v767 = vperm.slane %v114, 0
    %v769 = vsel %vm148, %v742, 0
    %771 = vmatpush.msra.mxu0 %v758
    %772 = vmatpush.msra.mxu0 %v757
    %773 = vmatpush.msra.mxu0 %v756
    %774 = vmatpush.msra.mxu0 %v755
    %775 = vmatpush.msra.mxu0 %v754
    %776 = vmatpush.msra.mxu0 %v753
    %777 = vmatpush.msra.mxu0 %v752
    %778 = vmatpush.msra.mxu0 %v751
    %779 = vmatpush.msra.mxu0 %v750
    %780 = vmatpush.msra.mxu0 %v749
    %781 = vmatpush.msra.mxu0 %v748
    %782 = vmatpush.msra.mxu0 %v747
    %783 = vmatpush.msra.mxu0 %v746
    %784 = vmatpush.msra.mxu0 %v745
    %785 = vmatpush.msra.mxu0 %v744
    %786 = vmatpush.msra.mxu0 %v743
    %787 = vmatmul.f32.gmra.mxu0 %v741
    %v788 = vpop.f32.mrf.mxu0
    %v789 = vadd.f32 %v767, %v788
    %790 = vdwg.mxu0
    %791 = vmatpush.msra.mxu0 0.0
    %792 = vmatpush.msra.mxu0 0.0
    %793 = vmatpush.msra.mxu0 0.0
    %794 = vmatpush.msra.mxu0 0.0
    %795 = vmatpush.msra.mxu0 0.0
    %796 = vmatpush.msra.mxu0 0.0
    %797 = vmatpush.msra.mxu0 0.0
    %798 = vmatpush.msra.mxu0 0.0
    %799 = vmatpush.msra.mxu0 %v766
    %800 = vmatpush.msra.mxu0 %v765
    %801 = vmatpush.msra.mxu0 %v764
    %802 = vmatpush.msra.mxu0 %v763
    %803 = vmatpush.msra.mxu0 %v762
    %804 = vmatpush.msra.mxu0 %v761
    %805 = vmatpush.msra.mxu0 %v760
    %806 = vmatpush.msra.mxu0 %v759
    %807 = vmatmul.f32.gmra.mxu0 %v769
    %v808 = vpop.f32.mrf.mxu0
    %v809 = vadd.f32 %v789, %v808
    %810 = vdwg.mxu0
    %v811 = vxor.u32 %v809, 2147483648
    %v812 = vmul.f32 %v811, 1.442695
    %v813 = vpow.pop %v812
    %v814 = vadd.f32 %v813, 1.0
    %v815 = vrcp.pop %v814
    %v816 = vmul.f32 %v814, %v815
    %v817 = vsub.f32 1.0, %v816
    %v818 = vmul.f32 %v815, %v817
    %v819 = vadd.f32 %v815, %v818
    %vm820 = vweird.f32 %v814
    %vm821 = vweird.f32 %v815
    %vm822 = vmor %vm820, %vm821
    %v823 = vsel %vm822, %v815, %v819
    %v824 = vand.u32 2147483647, %v814
    %vm825 = vcmp.eq.f32.partialorder %v824, 8.507059e+37
    %v826 = vand.u32 %v814, 2147483648
    %v827 = vor.u32 1.1754944e-38, %v826
    %v828 = vsel %vm825, %v827, %v823
    %v829 = vmul.f32 1.0, %v828
    %v830 = vperm.slane %v111, 0
    %v832 = vsel %vm145, %v809, 0
    %834 = vmatpush.msra.mxu0 0.0
    %835 = vmatpush.msra.mxu0 0.0
    %836 = vmatpush.msra.mxu0 0.0
    %837 = vmatpush.msra.mxu0 0.0
    %838 = vmatpush.msra.mxu0 0.0
    %839 = vmatpush.msra.mxu0 0.0
    %840 = vmatpush.msra.mxu0 0.0
    %841 = vmatpush.msra.mxu0 0.0
    %842 = vmatpush.msra.mxu0 0.0
    %843 = vmatpush.msra.mxu0 0.0
    %844 = vmatpush.msra.mxu0 0.0
    %845 = vmatpush.msra.mxu0 0.0
    %846 = vmatpush.msra.mxu0 %v85
    %847 = vmatpush.msra.mxu0 %v84
    %848 = vmatpush.msra.mxu0 %v83
    %849 = vmatpush.msra.mxu0 %v82
    %850 = vmatmul.f32.gmra.mxu0 %v832
    %v851 = vpop.f32.mrf.mxu0
    %v852 = vadd.f32 %v830, %v851
    %853 = vdwg.mxu0
    %vm854 = vcmask 1041408
    %v855 = vsel %vm854, %v852, -inf
    %856 = vmax.xlane.f32.xlu0 %v855
    %v857 = vpop.xlane.xlu0 %856
    %v858 = vsub.f32 %v852, %v857
    %v859 = vmul.f32 %v858, 1.442695
    %v860 = vpow.pop %v859
    %v861 = vsel %vm854, %v860, 0.0
    %862 = vadd.xlane.f32.xlu0 %v861
    %v863 = vpop.xlane.xlu0 %862
    %v864 = vrcp.pop %v863
    %v865 = vmul.f32 %v860, %v864
    %867 = vset.pattern.permute.xlu0 32
    %868 = vperm.xlu0 %867, %v829
    %v869 = vpop.permute.xlu0 %868
    %v871 = vmul.f32 %v869, %v865
    %v872 = vsub.f32 1.0, %v829
    %874 = vset.pattern.permute.xlu0 32
    %875 = vperm.xlu0 %874, %v872
    %v876 = vpop.permute.xlu0 %875
    %v878 = vperm.slane %v509, %v442
    %v879 = vperm.slane %v514, %v442
    %v880 = vsel %vm445, %v879, %v878
    %v882 = vmul.f32 %v876, %v880
    %v883 = vld [vmem:[#allocation5] sm:$0x3]
    %v884 = vadd.s32 %v442, 128
    %v885 = vperm.slane %v883, 0
    %v886 = vlaneseq
    %v887 = vshrl.u32 %v886, 7
    %889 = vset.pattern.permute.xlu0 %v887
    %890 = vperm.xlu0 %889, %v885
    %v891 = vpop.permute.xlu0 %890
    %v892 = vperm.slane %v883, 1
    %v893 = vlaneseq
    %v894 = vshrl.u32 %v893, 7
    %896 = vset.pattern.permute.xlu0 %v894
    %897 = vperm.xlu0 %896, %v892
    %v898 = vpop.permute.xlu0 %897
    %vm899 = vcmp.eq.s32.totalorder %v442, %v891
    %vm900 = vcmp.eq.s32.totalorder %v884, %v891
    %vm901 = vcmp.eq.s32.totalorder %v442, %v898
    %vm902 = vcmp.eq.s32.totalorder %v884, %v898
    %v903 = vsel %vm899, 1, 0
    %v904 = vsel %vm900, 1, 0
    %v905 = vsel %vm901, 1, 0
    %v906 = vsel %vm902, 1, 0
    %v907 = vcvt.s32.f32 %v903
    %v908 = vcvt.s32.f32 %v904
    %v909 = vcvt.s32.f32 %v905
    %v910 = vcvt.s32.f32 %v906
    %v911 = vperm.slane %v882, 0
    %v912 = vlaneseq
    %v913 = vshrl.u32 %v912, 7
    %915 = vset.pattern.permute.xlu0 %v913
    %916 = vperm.xlu0 %915, %v911
    %v917 = vpop.permute.xlu0 %916
    %v918 = vperm.slane %v882, 1
    %v919 = vlaneseq
    %v920 = vshrl.u32 %v919, 7
    %922 = vset.pattern.permute.xlu0 %v920
    %923 = vperm.xlu0 %922, %v918
    %v924 = vpop.permute.xlu0 %923
    %v925 = vmul.f32 %v917, %v907
    %v926 = vmul.f32 %v917, %v908
    %v927 = vmul.f32 %v924, %v909
    %v928 = vmul.f32 %v924, %v910
    %v929 = vrot.slane %v925, 4
    %v930 = vadd.f32 %v925, %v929
    %v931 = vrot.slane %v930, 2
    %v932 = vadd.f32 %v930, %v931
    %v933 = vrot.slane %v932, 1
    %v934 = vadd.f32 %v932, %v933
    %vm935 = vcmask 130048
    %v936 = vsel %vm935, %v926, 0.0
    %v937 = vrot.slane %v936, 4
    %v938 = vadd.f32 %v936, %v937
    %v939 = vrot.slane %v938, 2
    %v940 = vadd.f32 %v938, %v939
    %v941 = vrot.slane %v940, 1
    %v942 = vadd.f32 %v940, %v941
    %v943 = vrot.slane %v927, 4
    %v944 = vadd.f32 %v927, %v943
    %v945 = vrot.slane %v944, 2
    %v946 = vadd.f32 %v944, %v945
    %v947 = vrot.slane %v946, 1
    %v948 = vadd.f32 %v946, %v947
    %v949 = vsel %vm935, %v928, 0.0
    %v950 = vrot.slane %v949, 4
    %v951 = vadd.f32 %v949, %v950
    %v952 = vrot.slane %v951, 2
    %v953 = vadd.f32 %v951, %v952
    %v954 = vrot.slane %v953, 1
    %v955 = vadd.f32 %v953, %v954
    %v960 = vsel %vm445, %v948, %v934
    %v961 = vsel %vm445, %v955, %v942
    %v964 = vadd.f32 %v871, %v960
    %v965 = vadd.f32 %v961, 0.0
    %966 = vrot.lane.b32.xlu0 %v213, 80
    %v967 = vpop.permute.xlu0 %966
    %969 = vrot.lane.b32.xlu0 %v207, 16
    %v970 = vpop.permute.xlu0 %969
    %972 = vrot.lane.b32.xlu0 %v722, 80
    %v973 = vpop.permute.xlu0 %972
    %976 = vst [vmem:[#allocation1] ss:$4 sm:$0xff] %v448
    %v977 = vld.sshfl [vmem:[#allocation1] sm:$0xff pattern:$0x73625140]
    %978 = vrot.lane.b32.xlu0 %v977, 16
    %v979 = vpop.permute.xlu0 %978
    %v981 = vsel %vm935, %v965, %v967
    %vm982 = vcmask 392192
    %v983 = vsel %vm982, %v981, %v970
    %vm984 = vcmask 654336
    %v985 = vsel %vm984, %v983, %v973
    %v986 = vsel %vm935, %v973, %v979
    %vm987 = vcmask 195584
    %v988 = vsel %vm987, %v986, 0.0
    %v992 = vrot.slane %v985, 6
    %v993 = vrot.slane %v988, 4
    %v994 = vsel %vm854, %v964, %v992
    %vm995 = vcmask 1043456
    %v996 = vsel %vm995, %v994, %v993
    %998 = vst [vmem:[#allocation8] sm:$0x3f] %v996
    // Predicated region
    $region46: #{tpu_custom_call.1} parent=1 // pred_check
      _
    $region47: #{tpu_custom_call.1} parent=1 // pred_check_branch
      %1000 = sbr.rel (0) target = $region49
    $region48: #{tpu_custom_call.1} parent=1 // pred_region
      %1002 = vsyncadd [#allocation4], 0
      %s1004 = sshll.u32 [#allocation8], 4
      %s1005 = int_to_ptr.vmem [resolvable:$true] %s1004
      %s1006 = sshll.u32 %s8, 4
      %s1007 = int_to_ptr.hbm [resolvable:$true] %s1006
      %1009 = dma.vmem_to_hbm [thread:$0]  %s1005, 96, %s1007, [#allocation4]
    $region49: #{tpu_custom_call.1} parent=1 // pred_fallthru
      _
    // Predicated region
    $region50: #{tpu_custom_call.1} parent=1 // pred_check
      _
    $region51: #{tpu_custom_call.1} parent=1 // pred_check_branch
      %1011 = sbr.rel (0) target = $region53
    $region52: #{tpu_custom_call.1} parent=1 // pred_region
      %1013 = dma.done [#allocation4], 96
    $region53: #{tpu_custom_call.1} parent=1 // pred_fallthru
      _
    %1014 = vsyncpa [#allocation3], 1
    %1015 = vsyncpa [#allocation6], 1
    %1016 = vsyncpa [#allocation4], 1

</llo_original>
